<compile_context>
chip_gen: v7x
topology: tpu7x:2x2x1
jax: 0.10.0
libtpu: 0.0.40
codegen_flags: <defaults>
</compile_context>

<pallas_src>
import jax
import jax.numpy as jnp
from jax.experimental import pallas as pl
from jax.experimental.pallas import tpu as pltpu


def _focus_kernel(w_lo_ref, w_hi_ref, bias_ref, xu_ref, o_ref):
    # w_lo_ref/w_hi_ref: (Cout, 2*Cin) bf16  BN-scale-folded 1x1 conv weight halves
    # bias_ref:          (Cout, 1)     f32   folded BN bias
    # xu_ref:            (2*Cin, TL)   u32   each lane packs the (bf16, bf16) W-pair
    # o_ref:             (Cout, TL)    bf16  output tile, lane-dense along TL
    xu = xu_ref[...]
    # Unpack the two bf16 planes (pure VALU shift/mask + same-width bitcast;
    # no lane-stride-2 gather anywhere).
    x_lo = pltpu.bitcast(xu << 16, jnp.float32).astype(w_lo_ref.dtype)
    x_hi = pltpu.bitcast(xu & jnp.uint32(0xFFFF0000), jnp.float32).astype(w_hi_ref.dtype)

    acc = jnp.dot(w_lo_ref[...], x_lo, preferred_element_type=jnp.float32)
    acc = acc + jnp.dot(w_hi_ref[...], x_hi, preferred_element_type=jnp.float32)
    y = acc + bias_ref[...]

    # Swish / SiLU: y * sigmoid(y); divide on the EUP approx-reciprocal path.
    z = jnp.exp(-jnp.maximum(y, -60.0))           # exp(-y), overflow-safe
    o_ref[...] = (y * pl.reciprocal(1.0 + z, approx=True)).astype(o_ref.dtype)


def _pick_tile_l(L, cap):
    """Largest 128-aligned lane tile <= cap, preferring an exact divisor of L."""
    if L <= cap:
        return L
    cap = max(128, (cap // 128) * 128)
    for t in range(cap, 0, -128):
        if L % t == 0:
            return t
    return cap  # no aligned divisor: fall back to a ragged last tile


def focus_conv(xu, w_lo, w_hi, bias, *, tile_l=16384, out_dtype=jnp.bfloat16):
    """Fused per-batch (w_lo @ x_lo + w_hi @ x_hi) + bias, then Swish.

    xu:    [B, 2*Cin, L] uint32 -- each lane packs the (wp=0, wp=1) bf16 pair
    w_lo:  [Cout, 2*Cin] bf16   -- weight half matching the low 16 bits
    w_hi:  [Cout, 2*Cin] bf16   -- weight half matching the high 16 bits
    bias:  [Cout]        f32    -- folded BN bias
    returns [B, Cout, L] out_dtype
    """
    B, K2, L = xu.shape
    Cout = w_lo.shape[0]
    tl = _pick_tile_l(L, tile_l)
    num_l = pl.cdiv(L, tl)
    bias2d = bias.reshape(Cout, 1).astype(jnp.float32)

    return pl.pallas_call(
        _focus_kernel,
        out_shape=jax.ShapeDtypeStruct((B, Cout, L), out_dtype),
        grid_spec=pltpu.PrefetchScalarGridSpec(
            num_scalar_prefetch=0,
            # L tiles lead so v7x's megacore split has work even when B == 1.
            grid=(num_l, B),
            in_specs=[
                pl.BlockSpec((Cout, K2), lambda l, b: (0, 0)),   # resident weight (lo)
                pl.BlockSpec((Cout, K2), lambda l, b: (0, 0)),   # resident weight (hi)
                pl.BlockSpec((Cout, 1), lambda l, b: (0, 0)),    # resident bias
                pl.BlockSpec((None, K2, tl), lambda l, b: (b, 0, l)),
            ],
            out_specs=pl.BlockSpec((None, Cout, tl), lambda l, b: (b, 0, l)),
        ),
        compiler_params=pltpu.CompilerParams(
            dimension_semantics=("parallel", "parallel"),
            vmem_limit_bytes=40 * 1024 * 1024),
    )(w_lo, w_hi, bias2d, xu)


def focus_forward(x_nchw, params, *, tile_l=16384, out_dtype=jnp.bfloat16):
    """Focus forward: [B, Cin, H, W] (H, W even) -> [B, Cout, H/2, W/2]."""
    B, Cin, H, W = x_nchw.shape
    assert H % 2 == 0 and W % 2 == 0, "Focus expects even spatial dims"
    Ho, Wo = H // 2, W // 2
    L = Ho * Wo
    K2 = 2 * Cin

    # Fold BatchNorm into the conv weight (scale) and a per-channel bias.
    # eps = 1e-3 matches this module's norm_cfg (BN, eps=0.001).
    eps = 1e-3
    scale = params["bn_gamma"] * jax.lax.rsqrt(params["bn_var"] + eps)
    bias = params["bn_beta"] - params["bn_mean"] * scale
    w2d = params["conv_w"].reshape(params["conv_w"].shape[0], -1) * scale[:, None]
    # PyTorch concat order (TL, BL, TR, BR): column = wp*2Cin + hp*Cin + c, so
    # the first/second halves are the wp=0 / wp=1 weights, each ordered (hp, c).
    w_wp0 = w2d[:, :K2]
    w_wp1 = w2d[:, K2:]

    # Space-to-depth without a minor-dim gather: cast to bf16, pack each
    # horizontal (wp=0, wp=1) pair into one uint32 lane, then a minor-dim
    # preserving transpose to channels-first (rows ordered hp*Cin + c).
    xb = x_nchw.astype(jnp.bfloat16).reshape(B, Cin, Ho, 2, Wo, 2)
    xu = jax.lax.bitcast_convert_type(xb, jnp.uint32)            # [B, Cin, Ho, 2, Wo]
    xu = jnp.transpose(xu, (0, 3, 1, 2, 4)).reshape(B, K2, L)    # [B, 2Cin, L]

    # Which element of a packed pair sits in the low 16 bits? (traced probe,
    # jit-safe); pair the weight halves accordingly so the kernel's shift/mask
    # unpack matches the wrapper's packing on any endianness convention.
    probe = jax.lax.bitcast_convert_type(
        jnp.array([1.0, 2.0], dtype=jnp.bfloat16), jnp.uint32)
    first_is_low = (probe & jnp.uint32(0xFFFF)) == jnp.uint32(0x3F80)   # bf16(1.0)
    w_lo = jnp.where(first_is_low, w_wp0, w_wp1).astype(jnp.bfloat16)
    w_hi = jnp.where(first_is_low, w_wp1, w_wp0).astype(jnp.bfloat16)

    y = focus_conv(xu, w_lo, w_hi, bias, tile_l=tile_l, out_dtype=out_dtype)
    return y.reshape(B, -1, Ho, Wo)                 # free reshape back to NCHW


def init_params(key, in_channels, out_channels):
    k1, k2, k3, k4, k5 = jax.random.split(key, 5)
    conv_w = jax.random.normal(
        k1, (out_channels, in_channels * 4, 1, 1), jnp.float32) * 0.1
    bn_gamma = 1.0 + 0.1 * jax.random.normal(k2, (out_channels,), jnp.float32)
    bn_beta = 0.1 * jax.random.normal(k3, (out_channels,), jnp.float32)
    bn_mean = 0.1 * jax.random.normal(k4, (out_channels,), jnp.float32)
    bn_var = jnp.abs(jax.random.normal(k5, (out_channels,), jnp.float32)) + 0.5
    return dict(conv_w=conv_w, bn_gamma=bn_gamma, bn_beta=bn_beta,
                bn_mean=bn_mean, bn_var=bn_var)


def focus_reference(x_nchw, params):
    """Pure-JAX f32 reference (matches the PyTorch module)."""
    tl = x_nchw[..., ::2, ::2]
    tr = x_nchw[..., ::2, 1::2]
    bl = x_nchw[..., 1::2, ::2]
    br = x_nchw[..., 1::2, 1::2]
    xc = jnp.concatenate((tl, bl, tr, br), axis=1)
    w = params["conv_w"][:, :, 0, 0]                       # [Cout, 4*Cin]
    y = jnp.einsum("bchw,oc->bohw", xc, w)
    eps = 1e-3
    scale = params["bn_gamma"] / jnp.sqrt(params["bn_var"] + eps)
    bias = params["bn_beta"] - params["bn_mean"] * scale
    y = y * scale[None, :, None, None] + bias[None, :, None, None]
    return y * jax.nn.sigmoid(y)


if __name__ == "__main__":
    key = jax.random.PRNGKey(0)
    kx, kp = jax.random.split(key)

    B, Cin, H, W = 2, 4, 16, 16
    Cout = 32

    x = jax.random.normal(kx, (B, Cin, H, W), jnp.float32)
    params = init_params(kp, Cin, Cout)

    y_ref = focus_reference(x, params)

    fwd = jax.jit(focus_forward)
    y = jax.block_until_ready(fwd(x, params))

    assert y.shape == (B, Cout, H // 2, W // 2), y.shape
    # bf16 activation/weight streaming, bf16 output store and the approx
    # reciprocal keep rounding well under this bound; structural bugs (parity
    # pairing, channel order, BN folding) would show up as O(1) errors.
    max_err = float(jnp.max(jnp.abs(y.astype(jnp.float32) - y_ref)))
    assert max_err < 6e-2, max_err

    print("KERNEL_OK")
</pallas_src>

<mosaic_0001>
module attributes {stable_mosaic.version = 11 : i64} {
  func.func @_focus_kernel(%arg0: i32, %arg1: i32, %arg2: memref<32x8xbf16, #tpu.memory_space<vmem>>, %arg3: memref<32x8xbf16, #tpu.memory_space<vmem>>, %arg4: memref<32x1xf32, #tpu.memory_space<vmem>>, %arg5: memref<1x8x64xi32, #tpu.memory_space<vmem>>, %arg6: memref<1x32x64xbf16, #tpu.memory_space<vmem>>) attributes {dimension_semantics = [#tpu.dimension_semantics<parallel>, #tpu.dimension_semantics<parallel>], iteration_bounds = array<i64: 1, 2>, scalar_prefetch = 0 : i64, scratch_operands = 0 : i64, tpu.core_type = #tpu.core_type<tc>, window_params = [{pipeline_mode = #tpu.pipeline_mode<synchronous>, transform_indices = @transform_0, window_bounds = array<i64: 32, 8>}, {pipeline_mode = #tpu.pipeline_mode<synchronous>, transform_indices = @transform_1, window_bounds = array<i64: 32, 8>}, {pipeline_mode = #tpu.pipeline_mode<synchronous>, transform_indices = @transform_2, window_bounds = array<i64: 32, 1>}, {transform_indices = @transform_3, window_bounds = array<i64: 1, 8, 64>}, {transform_indices = @transform_4, window_bounds = array<i64: 1, 32, 64>}]} {
    %c0 = arith.constant 0 : index
    %c0_0 = arith.constant 0 : index
    %c0_1 = arith.constant 0 : index
    %0 = vector.load %arg5[%c0, %c0_0, %c0_1] : memref<1x8x64xi32, #tpu.memory_space<vmem>>, vector<1x8x64xi32>
    %1 = vector.shape_cast %0 : vector<1x8x64xi32> to vector<8x64xi32>
    %c16_i32 = arith.constant 16 : i32
    %2 = vector.broadcast %c16_i32 : i32 to vector<8x64xi32>
    %3 = arith.shli %1, %2 : vector<8x64xi32>
    %4 = tpu.bitcast %3 : vector<8x64xi32> -> vector<8x64xf32>
    %5 = arith.truncf %4 : vector<8x64xf32> to vector<8x64xbf16>
    %c-65536_i32 = arith.constant -65536 : i32
    %6 = vector.broadcast %c-65536_i32 : i32 to vector<8x64xi32>
    %7 = arith.andi %1, %6 : vector<8x64xi32>
    %8 = tpu.bitcast %7 : vector<8x64xi32> -> vector<8x64xf32>
    %9 = arith.truncf %8 : vector<8x64xf32> to vector<8x64xbf16>
    %c0_2 = arith.constant 0 : index
    %c0_3 = arith.constant 0 : index
    %10 = vector.load %arg2[%c0_2, %c0_3] : memref<32x8xbf16, #tpu.memory_space<vmem>>, vector<32x8xbf16>
    %cst = arith.constant dense<0.000000e+00> : vector<32x64xf32>
    %11 = tpu.matmul %10, %5, %cst {dimension_numbers = #tpu.dot_dimension_numbers<[1], [0], [0], [1], [0, 0, 1, 1], [], []>} : vector<32x8xbf16>, vector<8x64xbf16>, vector<32x64xf32> -> vector<32x64xf32>
    %c0_4 = arith.constant 0 : index
    %c0_5 = arith.constant 0 : index
    %12 = vector.load %arg3[%c0_4, %c0_5] : memref<32x8xbf16, #tpu.memory_space<vmem>>, vector<32x8xbf16>
    %cst_6 = arith.constant dense<0.000000e+00> : vector<32x64xf32>
    %13 = tpu.matmul %12, %9, %cst_6 {dimension_numbers = #tpu.dot_dimension_numbers<[1], [0], [0], [1], [0, 0, 1, 1], [], []>} : vector<32x8xbf16>, vector<8x64xbf16>, vector<32x64xf32> -> vector<32x64xf32>
    %14 = arith.addf %11, %13 : vector<32x64xf32>
    %c0_7 = arith.constant 0 : index
    %c0_8 = arith.constant 0 : index
    %15 = vector.load %arg4[%c0_7, %c0_8] : memref<32x1xf32, #tpu.memory_space<vmem>>, vector<32x1xf32>
    %16 = vector.broadcast %15 : vector<32x1xf32> to vector<32x64xf32>
    %17 = arith.addf %14, %16 : vector<32x64xf32>
    %cst_9 = arith.constant -6.000000e+01 : f32
    %18 = vector.broadcast %cst_9 : f32 to vector<32x64xf32>
    %19 = arith.maximumf %17, %18 : vector<32x64xf32>
    %cst_10 = arith.constant 0.000000e+00 : f32
    %20 = vector.broadcast %cst_10 : f32 to vector<32x64xf32>
    %21 = arith.subf %20, %19 : vector<32x64xf32>
    %22 = math.exp %21 : vector<32x64xf32>
    %cst_11 = arith.constant 1.000000e+00 : f32
    %23 = vector.broadcast %cst_11 : f32 to vector<32x64xf32>
    %24 = arith.addf %23, %22 : vector<32x64xf32>
    %25 = tpu.reciprocal %24 {approx = true} : vector<32x64xf32> -> vector<32x64xf32>
    %26 = arith.mulf %17, %25 : vector<32x64xf32>
    %27 = arith.truncf %26 : vector<32x64xf32> to vector<32x64xbf16>
    %c0_12 = arith.constant 0 : index
    %c0_13 = arith.constant 0 : index
    %c0_14 = arith.constant 0 : index
    %28 = vector.load %arg6[%c0_12, %c0_13, %c0_14] : memref<1x32x64xbf16, #tpu.memory_space<vmem>>, vector<1x32x64xbf16>
    %29 = vector.shape_cast %28 : vector<1x32x64xbf16> to vector<32x64xbf16>
    %30 = vector.shape_cast %27 : vector<32x64xbf16> to vector<1x32x64xbf16>
    tpu.vector_store %arg6[%c0_12, %c0_13, %c0_14], %30 {strides = array<i32>} : memref<1x32x64xbf16, #tpu.memory_space<vmem>>, vector<1x32x64xbf16>,
    return
  }
  func.func @transform_0(%arg0: i32, %arg1: i32) -> (i32, i32) {
    %c0_i32 = arith.constant 0 : i32
    %c0_i32_0 = arith.constant 0 : i32
    %c0_i32_1 = arith.constant 0 : i32
    return %c0_i32, %c0_i32_0 : i32, i32
  }
  func.func @transform_1(%arg0: i32, %arg1: i32) -> (i32, i32) {
    %c0_i32 = arith.constant 0 : i32
    %c0_i32_0 = arith.constant 0 : i32
    %c0_i32_1 = arith.constant 0 : i32
    return %c0_i32, %c0_i32_0 : i32, i32
  }
  func.func @transform_2(%arg0: i32, %arg1: i32) -> (i32, i32) {
    %c0_i32 = arith.constant 0 : i32
    %c0_i32_0 = arith.constant 0 : i32
    %c0_i32_1 = arith.constant 0 : i32
    return %c0_i32, %c0_i32_0 : i32, i32
  }
  func.func @transform_3(%arg0: i32, %arg1: i32) -> (i32, i32, i32) {
    %c0_i32 = arith.constant 0 : i32
    %c0_i32_0 = arith.constant 0 : i32
    return %arg1, %c0_i32, %arg0 : i32, i32, i32
  }
  func.func @transform_4(%arg0: i32, %arg1: i32) -> (i32, i32, i32) {
    %c0_i32 = arith.constant 0 : i32
    %c0_i32_0 = arith.constant 0 : i32
    return %arg1, %c0_i32, %arg0 : i32, i32, i32
  }
}

</mosaic_0001>

<llo_original>
// kernel: focus_forward.1
$region0: #{focus_forward.1}
  #allocation0 [shape = 'u32[]', space=smem, size = 0x4, offset = 0x4, fixed_abs, tag = 'smem constant byte address 0x4 - core index']
  #allocation1 [shape = 'u32[144,128]{1,0:T(1,128)}', space=vmem, size = 0x12000, scoped, tag = 'internal scratch']
  %s0 = inlined_call_operand.vmem [shape: bf16[32,8], index: 0, kind: input, shape index: {}]
  %s1 = inlined_call_operand.vmem [shape: bf16[32,8], index: 1, kind: input, shape index: {}]
  %s2 = inlined_call_operand.vmem [shape: f32[32,1], index: 2, kind: input, shape index: {}]
  %s3 = inlined_call_operand.vmem [shape: u32[2,8,64], index: 3, kind: input, shape index: {}]
  %s4 = inlined_call_operand.vmem [shape: bf16[2,32,64], index: 4, kind: output, shape index: {}]
  %s5 = sld [smem:[#allocation0]]
  $region49: #{focus_forward.1} parent=0
    _
  %s7 = ssub.s32 1, %s5
  %s8 = scalar_select 0, %s7, %s5
  loop: start=0, step=1, limit=4
  $region2: #{focus_forward.1} parent=0 // loop_pre_header
    _
  $region3: #{focus_forward.1} parent=0 // loop_header
    %s10 = sphi 0, %s14
    %p11 = scmp.ge.s32.totalorder %s10, 4
    %s17 = sphi 0, %s29
    %s18 = sphi 0, %s25
    %s19 = sphi 0, %s17
    %s20 = sphi 0, %s18
    %s21 = sphi 0, %s19
    %s22 = sphi 0, %s20
    %s30 = sphi 0, %s30
    %s32 = sphi 0, %s30
    %s33 = sphi 0, %s32
    %s47 = sphi 0, %s33
    %s51 = sphi 0, %s51
    %s53 = sphi 0, %s51
    %s54 = sphi 0, %s53
    %s68 = sphi 0, %s54
    %s72 = sphi 0, %s72
    %s74 = sphi 0, %s72
    %s75 = sphi 0, %s74
    %s89 = sphi 0, %s75
    %s97 = sphi 0, %s99
    %s100 = sphi 0, %s97
    %s101 = sphi 0, %s100
    %s117 = sphi 0, %s101
    %s125 = sphi 0, %s127
    %s128 = sphi 0, %s125
    %s129 = sphi 0, %s128
    %s145 = sphi 0, %s129
  $region4: #{focus_forward.1} parent=0 // loop_header_branch
    %13 = sbr.rel (%p11) target = $region8
  $region5: #{focus_forward.1} parent=0 // loop_body
    %s15 = ssub.s32 %s10, 1
    %s16 = ssub.s32 %s10, 2
    %s23 = sadd.s32 1, %s18
    %p24 = scmp.ge.s32.totalorder %s23, 2
    %s25 = scalar_select %p24, 0, %s23
    %s26 = sadd.s32 1, %s17
    %s27 = scalar_select %p24, %s26, %s17
    %p28 = scmp.ge.s32.totalorder %s27, 1
    %s29 = scalar_select %p28, 0, %s27
    %s31 = sadd.s32 %s30, 1
    %p34 = scmp.eq.s32.totalorder %s10, 1
    %p35 = scmp.ne.s32.totalorder %s30, %s32
    %p36 = scmp.eq.s32.totalorder %s10, 0
    %p37 = por %p35, %p36
    %p38 = scmp.ne.s32.totalorder %s30, %s32
    %p39 = scmp.eq.s32.totalorder %s15, 1
    %p40 = por %p38, %p39
    %p41 = scmp.ne.s32.totalorder %s32, %s33
    %p42 = scmp.eq.s32.totalorder %s15, 0
    %p43 = por %p41, %p42
    %p44 = scmp.ne.s32.totalorder %s32, %s33
    %p45 = scmp.eq.s32.totalorder %s16, 1
    %p46 = por %p44, %p45
    %p48 = scmp.ne.s32.totalorder %s33, %s47
    %p49 = scmp.eq.s32.totalorder %s16, 0
    %p50 = por %p48, %p49
    %s52 = sadd.s32 %s51, 1
    %p55 = scmp.eq.s32.totalorder %s10, 1
    %p56 = scmp.ne.s32.totalorder %s51, %s53
    %p57 = scmp.eq.s32.totalorder %s10, 0
    %p58 = por %p56, %p57
    %p59 = scmp.ne.s32.totalorder %s51, %s53
    %p60 = scmp.eq.s32.totalorder %s15, 1
    %p61 = por %p59, %p60
    %p62 = scmp.ne.s32.totalorder %s53, %s54
    %p63 = scmp.eq.s32.totalorder %s15, 0
    %p64 = por %p62, %p63
    %p65 = scmp.ne.s32.totalorder %s53, %s54
    %p66 = scmp.eq.s32.totalorder %s16, 1
    %p67 = por %p65, %p66
    %p69 = scmp.ne.s32.totalorder %s54, %s68
    %p70 = scmp.eq.s32.totalorder %s16, 0
    %p71 = por %p69, %p70
    %s73 = sadd.s32 %s72, 1
    %p76 = scmp.eq.s32.totalorder %s10, 1
    %p77 = scmp.ne.s32.totalorder %s72, %s74
    %p78 = scmp.eq.s32.totalorder %s10, 0
    %p79 = por %p77, %p78
    %p80 = scmp.ne.s32.totalorder %s72, %s74
    %p81 = scmp.eq.s32.totalorder %s15, 1
    %p82 = por %p80, %p81
    %p83 = scmp.ne.s32.totalorder %s74, %s75
    %p84 = scmp.eq.s32.totalorder %s15, 0
    %p85 = por %p83, %p84
    %p86 = scmp.ne.s32.totalorder %s74, %s75
    %p87 = scmp.eq.s32.totalorder %s16, 1
    %p88 = por %p86, %p87
    %p90 = scmp.ne.s32.totalorder %s75, %s89
    %p91 = scmp.eq.s32.totalorder %s16, 0
    %p92 = por %p90, %p91
    %s93 = ssub.s32 %s18, %s25
    %s94 = ssub.s32 %s17, %s29
    %s95 = sor.u32 %s93, %s94
    %p96 = scmp.eq.s32.totalorder %s95, 0
    %s98 = sadd.s32 %s97, 1
    %s99 = scalar_select %p96, %s97, %s98
    %p102 = pneg %p96
    %p103 = scmp.eq.s32.totalorder %s10, 1
    %p104 = por %p102, %p103
    %p105 = scmp.ne.s32.totalorder %s97, %s100
    %p106 = scmp.eq.s32.totalorder %s10, 0
    %p107 = por %p105, %p106
    %p108 = scmp.ne.s32.totalorder %s97, %s100
    %p109 = scmp.eq.s32.totalorder %s15, 1
    %p110 = por %p108, %p109
    %p111 = scmp.ne.s32.totalorder %s100, %s101
    %p112 = scmp.eq.s32.totalorder %s15, 0
    %p113 = por %p111, %p112
    %p114 = scmp.ne.s32.totalorder %s100, %s101
    %p115 = scmp.eq.s32.totalorder %s16, 1
    %p116 = por %p114, %p115
    %p118 = scmp.ne.s32.totalorder %s101, %s117
    %p119 = scmp.eq.s32.totalorder %s16, 0
    %p120 = por %p118, %p119
    %s121 = ssub.s32 %s18, %s25
    %s122 = ssub.s32 %s17, %s29
    %s123 = sor.u32 %s121, %s122
    %p124 = scmp.eq.s32.totalorder %s123, 0
    %s126 = sadd.s32 %s125, 1
    %s127 = scalar_select %p124, %s125, %s126
    %p130 = pneg %p124
    %p131 = scmp.eq.s32.totalorder %s10, 1
    %p132 = por %p130, %p131
    %p133 = scmp.ne.s32.totalorder %s125, %s128
    %p134 = scmp.eq.s32.totalorder %s10, 0
    %p135 = por %p133, %p134
    %p136 = scmp.ne.s32.totalorder %s125, %s128
    %p137 = scmp.eq.s32.totalorder %s15, 1
    %p138 = por %p136, %p137
    %p139 = scmp.ne.s32.totalorder %s128, %s129
    %p140 = scmp.eq.s32.totalorder %s15, 0
    %p141 = por %p139, %p140
    %p142 = scmp.ne.s32.totalorder %s128, %s129
    %p143 = scmp.eq.s32.totalorder %s16, 1
    %p144 = por %p142, %p143
    %p146 = scmp.ne.s32.totalorder %s129, %s145
    %p147 = scmp.eq.s32.totalorder %s16, 0
    %p148 = por %p146, %p147
    %p149 = scmp.le.s32.totalorder 1, %s10
    %p150 = scmp.lt.s32.totalorder %s10, 3
    %p151 = pnand %p149, %p150
    %p152 = pneg %p151
    // Predicated region
    $region9: #{focus_forward.1} parent=5 // pred_check
      _
    $region10: #{focus_forward.1} parent=5 // pred_check_branch
      %154 = sbr.rel (%p151) target = $region12
    $region11: #{focus_forward.1} parent=5 // pred_region
      %s155 = ssub.s32 %s10, 1
      // Predicated region
      $region13: #{focus_forward.1} parent=11 // pred_check
        %p156 = pneg %p43
      $region14: #{focus_forward.1} parent=11 // pred_check_branch
        %158 = sbr.rel (%p156) target = $region16
      $region15: #{focus_forward.1} parent=11 // pred_region
        _
      $region16: #{focus_forward.1} parent=11 // pred_fallthru
        _
      // Predicated region
      $region17: #{focus_forward.1} parent=11 // pred_check
        %p159 = pneg %p64
      $region18: #{focus_forward.1} parent=11 // pred_check_branch
        %161 = sbr.rel (%p159) target = $region20
      $region19: #{focus_forward.1} parent=11 // pred_region
        _
      $region20: #{focus_forward.1} parent=11 // pred_fallthru
        _
      // Predicated region
      $region21: #{focus_forward.1} parent=11 // pred_check
        %p162 = pneg %p85
      $region22: #{focus_forward.1} parent=11 // pred_check_branch
        %164 = sbr.rel (%p162) target = $region24
      $region23: #{focus_forward.1} parent=11 // pred_region
        _
      $region24: #{focus_forward.1} parent=11 // pred_fallthru
        _
    $region12: #{focus_forward.1} parent=5 // pred_fallthru
      _
    %p165 = scmp.lt.s32.totalorder %s10, 2
    // Predicated region
    $region25: #{focus_forward.1} parent=5 // pred_check
      %p166 = pneg %p165
    $region26: #{focus_forward.1} parent=5 // pred_check_branch
      %168 = sbr.rel (%p166) target = $region28
    $region27: #{focus_forward.1} parent=5 // pred_region
      // Predicated region
      $region29: #{focus_forward.1} parent=27 // pred_check
        %p169 = pneg %p107
      $region30: #{focus_forward.1} parent=27 // pred_check_branch
        %171 = sbr.rel (%p169) target = $region32
      $region31: #{focus_forward.1} parent=27 // pred_region
        %p172 = scmp.lt.s32.totalorder %s18, 1
        %s173 = scalar_select %p172, %s18, 1
        %p174 = scmp.lt.s32.totalorder %s17, 0
        %s175 = scalar_select %p174, %s17, 0
        %s176 = sadd.s32 %s175, %s173
        %s177 = smul.addr %s176, 8
        %s178 = scalar_lea.vmem %s3, %s177
      $region32: #{focus_forward.1} parent=27 // pred_fallthru
        _
    $region28: #{focus_forward.1} parent=5 // pred_fallthru
      _
    %p179 = scmp.le.s32.totalorder 1, %s10
    %p180 = scmp.lt.s32.totalorder %s10, 3
    %p181 = pnand %p179, %p180
    %p182 = pneg %p181
    // Predicated region
    $region33: #{focus_forward.1} parent=5 // pred_check
      _
    $region34: #{focus_forward.1} parent=5 // pred_check_branch
      %184 = sbr.rel (%p181) target = $region36
    $region35: #{focus_forward.1} parent=5 // pred_region
      %s185 = ssub.s32 %s10, 1
      %p186 = pneg %p43
      %p187 = pneg %p40
      %p188 = pneg %p64
      %p189 = pneg %p61
      %p190 = pneg %p85
      %p191 = pneg %p82
      %p192 = scmp.lt.s32.totalorder %s20, 1
      %s193 = scalar_select %p192, %s20, 1
      %p194 = scmp.lt.s32.totalorder %s19, 0
      %s195 = scalar_select %p194, %s19, 0
      %s196 = sadd.s32 %s195, %s193
      %s197 = smul.addr %s196, 8
      %s198 = scalar_lea.vmem %s3, %s197
      %p199 = pneg %p113
      %p200 = pneg %p110
      %p201 = pneg %p141
      %p202 = pneg %p138
      %p203 = scmp.lt.s32.totalorder %s20, 1
      %s204 = scalar_select %p203, %s20, 1
      %p205 = scmp.lt.s32.totalorder %s19, 0
      %s206 = scalar_select %p205, %s19, 0
      %s207 = smul.addr %s204, 4
      %s208 = sadd.s32 %s206, %s207
      %s209 = smul.addr %s208, 4
      %s210 = scalar_lea.vmem %s4, %s209
      %p211 = scmp.lt.s32.totalorder %s20, 1
      %s212 = scalar_select %p211, %s20, 1
      %p213 = scmp.lt.s32.totalorder %s19, 0
      %s214 = scalar_select %p213, %s19, 0
      %s215 = sadd.s32 %s214, %s212
      %s216 = smul.addr %s215, 8
      %s217 = scalar_lea.vmem %s3, %s216
      %p218 = scmp.lt.s32.totalorder %s20, 1
      %s219 = scalar_select %p218, %s20, 1
      %p220 = scmp.lt.s32.totalorder %s19, 0
      %s221 = scalar_select %p220, %s19, 0
      %s222 = smul.addr %s219, 4
      %s223 = sadd.s32 %s221, %s222
      %s224 = smul.addr %s223, 4
      %s225 = scalar_lea.vmem %s4, %s224
      %v227 = vld [vmem:[%s217] sm:$0xff]
      %v228 = vshll.u32 %v227, 16
      %v230 = vpack.c.bf16 %v228, %v228
      %v231 = vand.u32 %v227, 4294901760
      %v233 = vpack.c.bf16 %v231, %v231
      %v234 = vld [vmem:[%s0] sm:$0xf]
      %v235 = vld [vmem:[%s0 + $0x4] sm:$0xf]
      %v236 = vld [vmem:[%s0 + $0x8] sm:$0xf]
      %v237 = vld [vmem:[%s0 + $0xc] sm:$0xf]
      %v238 = vld [vmem:[%s1] sm:$0xf]
      %v239 = vld [vmem:[%s1 + $0x4] sm:$0xf]
      %v240 = vld [vmem:[%s1 + $0x8] sm:$0xf]
      %v241 = vld [vmem:[%s1 + $0xc] sm:$0xf]
      %v246 = vunpack.c.l.b16 %v238
      %v247 = vunpack.c.l.b16 %v239
      %v248 = vunpack.c.l.b16 %v240
      %v249 = vunpack.c.l.b16 %v241
      %v250 = vpack.c.b16 %v247, %v246
      %v251 = vpack.c.b16 %v249, %v248
      %vm252 = vcmask 64512
      %v254 = vsel %vm252, %v250, 0
      %v257 = vsel %vm252, %v251, 0
      %vm259 = vcmask 1043456
      %v261 = vsel %vm259, %v233, 0
      %263 = vmatprep.subr.bf16.mxu0 0
      %264 = vmatpush1.bf16.msra.mxu0 %v261
      %265 = vmatprep.subr.bf16.mxu0 0
      %266 = vmatpush1.bf16.msra.mxu0 0
      %267 = vmatprep.subr.bf16.mxu0 0
      %268 = vmatpush1.bf16.msra.mxu0 0
      %269 = vmatprep.subr.bf16.mxu0 0
      %270 = vmatpush1.bf16.msra.mxu0 0
      %271 = vmatprep.subr.bf16.mxu0 0
      %272 = vmatpush1.bf16.msra.mxu0 0
      %273 = vmatprep.subr.bf16.mxu0 0
      %274 = vmatpush1.bf16.msra.mxu0 0
      %275 = vmatprep.subr.bf16.mxu0 0
      %276 = vmatpush1.bf16.msra.mxu0 0
      %277 = vmatprep.subr.bf16.mxu0 0
      %278 = vmatpush1.bf16.msra.mxu0 0
      %279 = vmatprep.subr.bf16.mxu0 0
      %280 = vmatpush1.bf16.msra.mxu0 0
      %281 = vmatprep.subr.bf16.mxu0 0
      %282 = vmatpush1.bf16.msra.mxu0 0
      %283 = vmatprep.subr.bf16.mxu0 0
      %284 = vmatpush1.bf16.msra.mxu0 0
      %285 = vmatprep.subr.bf16.mxu0 0
      %286 = vmatpush1.bf16.msra.mxu0 0
      %287 = vmatprep.subr.bf16.mxu0 0
      %288 = vmatpush1.bf16.msra.mxu0 0
      %289 = vmatprep.subr.bf16.mxu0 0
      %290 = vmatpush1.bf16.msra.mxu0 0
      %291 = vmatprep.subr.bf16.mxu0 0
      %292 = vmatpush1.bf16.msra.mxu0 0
      %293 = vmatprep.subr.bf16.mxu0 0
      %294 = vmatpush1.bf16.msra.mxu0 0
      %295 = vmatprep.mubr.bf16.mxu0 0
      %296 = vmatmul.mubr.bf16.gmra.mrb[0].mxu0 %v254
      %v297 = vpop.f32.mrb[0].mxu0
      %v298 = vadd.f32 0.0, %v297
      %v299 = vpop.f32.mrb[0].mxu0
      %v300 = vpop.f32.mrb[0].mxu0
      %v301 = vadd.f32 0.0, %v300
      %v302 = vpop.f32.mrb[0].mxu0
      %303 = vmatprep.mubr.bf16.mxu0 0
      %304 = vmatmul.mubr.bf16.gmra.mrb[0].mxu0 %v257
      %v305 = vpop.f32.mrb[0].mxu0
      %v306 = vadd.f32 0.0, %v305
      %v307 = vpop.f32.mrb[0].mxu0
      %v308 = vpop.f32.mrb[0].mxu0
      %v309 = vadd.f32 0.0, %v308
      %v310 = vpop.f32.mrb[0].mxu0
      %311 = vdwg.mxu0
      %v316 = vunpack.c.l.b16 %v234
      %v317 = vunpack.c.l.b16 %v235
      %v318 = vunpack.c.l.b16 %v236
      %v319 = vunpack.c.l.b16 %v237
      %v320 = vpack.c.b16 %v317, %v316
      %v321 = vpack.c.b16 %v319, %v318
      %v323 = vsel %vm252, %v320, 0
      %v326 = vsel %vm252, %v321, 0
      %v329 = vsel %vm259, %v230, 0
      %331 = vmatprep.subr.bf16.mxu0 0
      %332 = vmatpush1.bf16.msra.mxu0 %v329
      %333 = vmatprep.subr.bf16.mxu0 0
      %334 = vmatpush1.bf16.msra.mxu0 0
      %335 = vmatprep.subr.bf16.mxu0 0
      %336 = vmatpush1.bf16.msra.mxu0 0
      %337 = vmatprep.subr.bf16.mxu0 0
      %338 = vmatpush1.bf16.msra.mxu0 0
      %339 = vmatprep.subr.bf16.mxu0 0
      %340 = vmatpush1.bf16.msra.mxu0 0
      %341 = vmatprep.subr.bf16.mxu0 0
      %342 = vmatpush1.bf16.msra.mxu0 0
      %343 = vmatprep.subr.bf16.mxu0 0
      %344 = vmatpush1.bf16.msra.mxu0 0
      %345 = vmatprep.subr.bf16.mxu0 0
      %346 = vmatpush1.bf16.msra.mxu0 0
      %347 = vmatprep.subr.bf16.mxu0 0
      %348 = vmatpush1.bf16.msra.mxu0 0
      %349 = vmatprep.subr.bf16.mxu0 0
      %350 = vmatpush1.bf16.msra.mxu0 0
      %351 = vmatprep.subr.bf16.mxu0 0
      %352 = vmatpush1.bf16.msra.mxu0 0
      %353 = vmatprep.subr.bf16.mxu0 0
      %354 = vmatpush1.bf16.msra.mxu0 0
      %355 = vmatprep.subr.bf16.mxu0 0
      %356 = vmatpush1.bf16.msra.mxu0 0
      %357 = vmatprep.subr.bf16.mxu0 0
      %358 = vmatpush1.bf16.msra.mxu0 0
      %359 = vmatprep.subr.bf16.mxu0 0
      %360 = vmatpush1.bf16.msra.mxu0 0
      %361 = vmatprep.subr.bf16.mxu0 0
      %362 = vmatpush1.bf16.msra.mxu0 0
      %363 = vmatprep.mubr.bf16.mxu0 0
      %364 = vmatmul.mubr.bf16.gmra.mrb[0].mxu0 %v323
      %v365 = vpop.f32.mrb[0].mxu0
      %v366 = vadd.f32 %v298, %v365
      %v367 = vpop.f32.mrb[0].mxu0
      %v368 = vpop.f32.mrb[0].mxu0
      %v369 = vadd.f32 %v301, %v368
      %v370 = vpop.f32.mrb[0].mxu0
      %371 = vmatprep.mubr.bf16.mxu0 0
      %372 = vmatmul.mubr.bf16.gmra.mrb[0].mxu0 %v326
      %v373 = vpop.f32.mrb[0].mxu0
      %v374 = vadd.f32 %v306, %v373
      %v375 = vpop.f32.mrb[0].mxu0
      %v376 = vpop.f32.mrb[0].mxu0
      %v377 = vadd.f32 %v309, %v376
      %v378 = vpop.f32.mrb[0].mxu0
      %379 = vdwg.mxu0
      %v380 = vld [vmem:[%s2] sm:$0xff]
      %v381 = vld [vmem:[%s2 + $0x8] sm:$0xff]
      %v382 = vld [vmem:[%s2 + $0x10] sm:$0xff]
      %v383 = vld [vmem:[%s2 + $0x18] sm:$0xff]
      %385 = vset.pattern.permute.xlu0 0
      %386 = vperm.xlu0 %385, %v380
      %v387 = vpop.permute.xlu0 %386
      %390 = vset.pattern.permute.xlu0 0
      %391 = vperm.xlu0 %390, %v381
      %v392 = vpop.permute.xlu0 %391
      %395 = vset.pattern.permute.xlu0 0
      %396 = vperm.xlu0 %395, %v382
      %v397 = vpop.permute.xlu0 %396
      %400 = vset.pattern.permute.xlu0 0
      %401 = vperm.xlu0 %400, %v383
      %v402 = vpop.permute.xlu0 %401
      %v404 = vadd.f32 %v366, %v387
      %v405 = vadd.f32 %v369, %v392
      %v406 = vadd.f32 %v374, %v397
      %v407 = vadd.f32 %v377, %v402
      %v408 = vmax.f32 %v404, -60.0
      %v409 = vmax.f32 %v405, -60.0
      %v410 = vmax.f32 %v406, -60.0
      %v411 = vmax.f32 %v407, -60.0
      %v412 = vsub.f32 0.0, %v408
      %v413 = vsub.f32 0.0, %v409
      %v414 = vsub.f32 0.0, %v410
      %v415 = vsub.f32 0.0, %v411
      %v416 = vmul.f32 %v412, 1.442695
      %v417 = vpow.pop %v416
      %v418 = vmul.f32 %v413, 1.442695
      %v419 = vpow.pop %v418
      %v420 = vmul.f32 %v414, 1.442695
      %v421 = vpow.pop %v420
      %v422 = vmul.f32 %v415, 1.442695
      %v423 = vpow.pop %v422
      %v424 = vadd.f32 %v417, 1.0
      %v425 = vadd.f32 %v419, 1.0
      %v426 = vadd.f32 %v421, 1.0
      %v427 = vadd.f32 %v423, 1.0
      %v428 = vrcp.pop %v424
      %v429 = vrcp.pop %v425
      %v430 = vrcp.pop %v426
      %v431 = vrcp.pop %v427
      %v432 = vmul.f32 %v404, %v428
      %v433 = vmul.f32 %v405, %v429
      %v434 = vmul.f32 %v406, %v430
      %v435 = vmul.f32 %v407, %v431
      %v436 = vpack.c.bf16 %v433, %v432
      %v437 = vpack.c.bf16 %v435, %v434
      %v440 = vunpack.c.l.b16 %v436
      %v441 = vunpack.c.h.b16 %v436
      %v442 = vunpack.c.l.b16 %v437
      %v443 = vunpack.c.h.b16 %v437
      %v444 = vpack.c.b16 %v440, %v440
      %v445 = vpack.c.b16 %v441, %v441
      %v446 = vpack.c.b16 %v442, %v442
      %v447 = vpack.c.b16 %v443, %v443
      %vm452 = vcmask 519168
      %453 = vst.msk [vmem:[%s225] sm:$0xf] %vm452, %v444
      %454 = vst.msk [vmem:[%s225 + $0x4] sm:$0xf] %vm452, %v445
      %455 = vst.msk [vmem:[%s225 + $0x8] sm:$0xf] %vm452, %v446
      %456 = vst.msk [vmem:[%s225 + $0xc] sm:$0xf] %vm452, %v447
      %p457 = scmp.lt.s32.totalorder %s20, 1
      %s458 = scalar_select %p457, %s20, 1
      %p459 = scmp.lt.s32.totalorder %s19, 0
      %s460 = scalar_select %p459, %s19, 0
      %s461 = smul.addr %s458, 4
      %s462 = sadd.s32 %s460, %s461
      %s463 = smul.addr %s462, 4
      %s464 = scalar_lea.vmem %s4, %s463
      // Predicated region
      $region37: #{focus_forward.1} parent=35 // pred_check
        %p465 = pneg %p138
      $region38: #{focus_forward.1} parent=35 // pred_check_branch
        %467 = sbr.rel (%p465) target = $region40
      $region39: #{focus_forward.1} parent=35 // pred_region
        _
      $region40: #{focus_forward.1} parent=35 // pred_fallthru
        _
    $region36: #{focus_forward.1} parent=5 // pred_fallthru
      _
    %p468 = scmp.le.s32.totalorder 2, %s10
    // Predicated region
    $region41: #{focus_forward.1} parent=5 // pred_check
      %p469 = pneg %p468
    $region42: #{focus_forward.1} parent=5 // pred_check_branch
      %471 = sbr.rel (%p469) target = $region44
    $region43: #{focus_forward.1} parent=5 // pred_region
      %s472 = ssub.s32 %s10, 2
      // Predicated region
      $region45: #{focus_forward.1} parent=43 // pred_check
        %p473 = pneg %p144
      $region46: #{focus_forward.1} parent=43 // pred_check_branch
        %475 = sbr.rel (%p473) target = $region48
      $region47: #{focus_forward.1} parent=43 // pred_region
        %p476 = scmp.lt.s32.totalorder %s22, 1
        %s477 = scalar_select %p476, %s22, 1
        %p478 = scmp.lt.s32.totalorder %s21, 0
        %s479 = scalar_select %p478, %s21, 0
        %s480 = smul.addr %s477, 4
        %s481 = sadd.s32 %s479, %s480
        %s482 = smul.addr %s481, 4
        %s483 = scalar_lea.vmem %s4, %s482
      $region48: #{focus_forward.1} parent=43 // pred_fallthru
        _
    $region44: #{focus_forward.1} parent=5 // pred_fallthru
      _
  $region6: #{focus_forward.1} parent=0 // loop_footer
    %s14 = sadd.s32 1, %s10
  $region7: #{focus_forward.1} parent=0 // loop_footer_branch
    %9 = sbr.rel target = $region3
  $region8: #{focus_forward.1} parent=0 // loop_exit
    _

</llo_original>
